<compile_context>
chip_gen: v7x
topology: tpu7x:2x2x1
jax: 0.10.0
libtpu: 0.0.40
codegen_flags: <defaults>
</compile_context>

<pallas_src>
import functools
import math

import jax
import jax.numpy as jnp
from jax import lax
from jax.experimental import pallas as pl
from jax.experimental.pallas import tpu as pltpu

_NEG_BIG = -1e30  # finite "-inf" for masking padded class columns (NaN-safe)


def _round_up(a, b):
    return (a + b - 1) // b * b


def _cdiv(a, b):
    return (a + b - 1) // b


def _arcface_fused_kernel(label_ref, xn_ref, w_ref, invw_ref,
                          out_ref, lse_ref, tgt_ref,
                          m_sc, l_sc, t_sc, *,
                          cos_m, sin_m, th, mm, scale, easy_margin, ls_eps,
                          out_features, tc, tiles_per_shard, mask_pad):
    """Grid = (class shards, batch tiles, class tiles per shard).

    The last ('arbitrary') axis is the CE reduction; the leading shard axis
    lets a 2-TensorCore chip (v7x) stream half the weight per core even when
    the whole batch fits one tile.  Each (shard, batch-tile) emits a partial
    (logsumexp, target-logit) pair that the wrapper combines.
    """
    s = pl.program_id(0)
    j = pl.program_id(2)
    j_abs = s * tiles_per_shard + j

    @pl.when(j == 0)
    def _():
        m_sc[...] = jnp.full_like(m_sc, -jnp.inf)
        l_sc[...] = jnp.zeros_like(l_sc)
        t_sc[...] = jnp.zeros_like(t_sc)

    # cosine = (x/||x|| . w^T) * (1/||w||): contract last dims of both operands
    # (no (tc, D) transpose materialized), f32 MXU accumulation, per-class
    # inverse norm folded into a post-matmul column scale.
    cos_raw = lax.dot_general(xn_ref[...], w_ref[...], (((1,), (1,)), ((), ())),
                              preferred_element_type=jnp.float32)   # (tb, tc)
    cosine = cos_raw * invw_ref[...]                                # (1, tc) bcast

    labels = label_ref[...]                                         # (tb, 1) int32
    col = j_abs * tc + lax.broadcasted_iota(jnp.int32, cosine.shape, 1)
    is_target = col == labels                                       # (tb, tc)

    if ls_eps == 0.0:
        # Margin only touches the target column: run sqrt/select on the (tb,1)
        # target-cosine vector instead of the whole (tb, tc) tile.
        tgt_cos = jnp.sum(jnp.where(is_target, cosine, 0.0),
                          axis=-1, keepdims=True)                   # (tb, 1)
        sine_t = jnp.sqrt(jnp.clip(1.0 - tgt_cos * tgt_cos, 0.0, 1.0))
        phi_t = tgt_cos * cos_m - sine_t * sin_m
        if easy_margin:
            phi_t = jnp.where(tgt_cos > 0.0, phi_t, tgt_cos)
        else:
            phi_t = jnp.where(tgt_cos > th, phi_t, tgt_cos - mm)
        delta = (phi_t - tgt_cos) * scale                           # (tb, 1)
        out = cosine * scale + jnp.where(is_target, delta, 0.0)
        # target logit == scale * phi_t; accumulate it only if the label falls
        # inside this class tile (cheap (tb,1) range compare, no full-tile op).
        lo = j_abs * tc
        has_tgt = jnp.logical_and(labels >= lo, labels < lo + tc)
        t_sc[...] += jnp.where(has_tgt, phi_t * scale, 0.0)
    else:
        one_hot = (1.0 - ls_eps) * is_target.astype(jnp.float32) \
            + ls_eps / out_features
        sine = jnp.sqrt(jnp.clip(1.0 - cosine * cosine, 0.0, 1.0))
        phi = cosine * cos_m - sine * sin_m
        if easy_margin:
            phi = jnp.where(cosine > 0.0, phi, cosine)
        else:
            phi = jnp.where(cosine > th, phi, cosine - mm)
        out = (cosine + one_hot * (phi - cosine)) * scale
        t_sc[...] += jnp.sum(jnp.where(is_target, out, 0.0),
                             axis=-1, keepdims=True)

    out_ref[...] = out.astype(out_ref.dtype)

    # ---- fused cross-entropy: online logsumexp over this shard's class tiles.
    if mask_pad:
        # Finite large-negative mask: exp() underflows to 0 exactly, and an
        # all-padding tile/shard can never produce (-inf) - (-inf) = NaN.
        logits_ce = jnp.where(col < out_features, out, _NEG_BIG)
    else:
        logits_ce = out
    m_new = jnp.maximum(m_sc[...], jnp.max(logits_ce, axis=-1, keepdims=True))
    l_sc[...] = jnp.exp(m_sc[...] - m_new) * l_sc[...] + jnp.sum(
        jnp.exp(logits_ce - m_new), axis=-1, keepdims=True)
    m_sc[...] = m_new

    @pl.when(j == pl.num_programs(2) - 1)
    def _():
        lse_ref[0] = m_sc[...] + jnp.log(l_sc[...])   # partial logsumexp
        tgt_ref[0] = t_sc[...]                        # partial target logit


def arc_margin_product(x, weight, label, *, scale=30.0, margin=0.5,
                       easy_margin=False, ls_eps=0.0, inv_w=None,
                       mxu_dtype=jnp.bfloat16, tb=256, tc=2048,
                       num_class_shards=2):
    """ArcMarginProduct forward: returns (scaled logits (B, C), mean CE loss).

    Fast path: store `weight` in bf16 and pass a cached `inv_w = 1/||w_row||`
    (f32, shape (C,)); the wrapper then never touches the full weight and the
    kernel streams it from HBM exactly once per call.
    """
    B, D = x.shape
    C, D2 = weight.shape
    assert D == D2

    cos_m = math.cos(margin)
    sin_m = math.sin(margin)
    th = math.cos(math.pi - margin)
    mm = math.sin(math.pi - margin) * margin

    # Hoisted x-normalization (tiny: (B, D)).
    x_f32 = x.astype(jnp.float32)
    xn = x_f32 * lax.rsqrt(
        jnp.maximum(jnp.sum(x_f32 * x_f32, axis=1, keepdims=True), 1e-24))
    xn_mxu = xn.astype(mxu_dtype)

    # Weight row inverse-norms: a single fused read of the weight as stored
    # (cast+square+reduce fuse in XLA; no f32 copy materialized).  Pass a
    # cached inv_w to skip even this read.
    if inv_w is None:
        inv_w = lax.rsqrt(jnp.maximum(
            jnp.sum(jnp.square(weight.astype(jnp.float32)), axis=1), 1e-24))
    inv_w = inv_w.astype(jnp.float32)

    # bf16 MXU operands by default; no cast when the weight is already bf16.
    # (bf16 weight near the margin threshold can flip the (cos > th) branch
    #  vs an f32 reference -- pass mxu_dtype=jnp.float32 for exactness.)
    w_mxu = weight if weight.dtype == mxu_dtype else weight.astype(mxu_dtype)
    label_i = label.astype(jnp.int32)

    # --- tiling ---
    tb_eff = min(tb, _round_up(B, 8))
    tc_eff = min(tc, _round_up(C, 128))
    B_pad = _round_up(B, tb_eff)
    t_raw = _cdiv(C, tc_eff)
    n_shards = max(1, min(int(num_class_shards), t_raw))
    tiles_per_shard = _cdiv(t_raw, n_shards)
    n_class_tiles = n_shards * tiles_per_shard
    C_pad = n_class_tiles * tc_eff

    if B_pad != B:
        xn_mxu = jnp.pad(xn_mxu, ((0, B_pad - B), (0, 0)))
        label_i = jnp.pad(label_i, (0, B_pad - B))
    if C_pad != C:
        # TODO(synk): store the weight pre-padded to a class-tile multiple (or
        # tile-aligned C) to avoid this one extra weight copy per call.
        w_mxu = jnp.pad(w_mxu, ((0, C_pad - C), (0, 0)))
        inv_w = jnp.pad(inv_w, (0, C_pad - C))

    label2d = label_i.reshape(B_pad, 1)
    inv_w2d = inv_w.reshape(1, C_pad)

    grid = (n_shards, B_pad // tb_eff, tiles_per_shard)
    tps = tiles_per_shard

    mxu_bytes = jnp.dtype(mxu_dtype).itemsize
    vmem_est = (2 * tc_eff * D * mxu_bytes        # weight double buffer
                + 2 * tb_eff * D * mxu_bytes      # xn double buffer
                + 2 * tb_eff * tc_eff * 4         # logits double buffer
                + 8 * tb_eff * tc_eff * 4)        # epilogue temporaries headroom
    vmem_limit = int(min(48 * 2**20, max(32 * 2**20, vmem_est + 8 * 2**20)))

    cost = pl.CostEstimate(
        flops=int(2 * B_pad * D * C_pad + 12 * B_pad * C_pad),
        transcendentals=int(B_pad * C_pad + 8 * B_pad * n_class_tiles),
        bytes_accessed=int((B_pad + C_pad) * D * mxu_bytes + B_pad * C_pad * 4
                           + B_pad * 16 * n_shards))

    kernel = functools.partial(
        _arcface_fused_kernel,
        cos_m=cos_m, sin_m=sin_m, th=th, mm=mm, scale=float(scale),
        easy_margin=bool(easy_margin), ls_eps=float(ls_eps),
        out_features=C, tc=tc_eff, tiles_per_shard=tps,
        mask_pad=(C_pad != C))

    logits_pad, lse_part, tgt_part = pl.pallas_call(
        kernel,
        out_shape=(jax.ShapeDtypeStruct((B_pad, C_pad), jnp.float32),
                   jax.ShapeDtypeStruct((n_shards, B_pad, 1), jnp.float32),
                   jax.ShapeDtypeStruct((n_shards, B_pad, 1), jnp.float32)),
        grid_spec=pltpu.PrefetchScalarGridSpec(
            num_scalar_prefetch=0,
            grid=grid,
            in_specs=[
                pl.BlockSpec((tb_eff, 1), lambda s, i, j: (i, 0)),           # labels
                pl.BlockSpec((tb_eff, D), lambda s, i, j: (i, 0)),           # xn
                pl.BlockSpec((tc_eff, D), lambda s, i, j: (s * tps + j, 0)),  # weight
                pl.BlockSpec((1, tc_eff), lambda s, i, j: (0, s * tps + j)),  # 1/||w||
            ],
            out_specs=(
                pl.BlockSpec((tb_eff, tc_eff), lambda s, i, j: (i, s * tps + j)),
                pl.BlockSpec((1, tb_eff, 1), lambda s, i, j: (s, i, 0)),
                pl.BlockSpec((1, tb_eff, 1), lambda s, i, j: (s, i, 0)),
            ),
            scratch_shapes=[pltpu.VMEM((tb_eff, 1), jnp.float32),   # running max
                            pltpu.VMEM((tb_eff, 1), jnp.float32),   # running sum
                            pltpu.VMEM((tb_eff, 1), jnp.float32)],  # target logit
        ),
        compiler_params=pltpu.CompilerParams(
            dimension_semantics=("parallel", "parallel", "arbitrary"),
            vmem_limit_bytes=vmem_limit),
        cost_estimate=cost,
    )(label2d, xn_mxu, w_mxu, inv_w2d)

    logits = logits_pad[:B, :C]

    # Combine per-shard partial (logsumexp, target-logit) stats.
    lse_p = lse_part[:, :, 0]                     # (S, B_pad)
    tgt_p = tgt_part[:, :, 0]
    m = jnp.max(lse_p, axis=0)
    lse = m + jnp.log(jnp.sum(jnp.exp(lse_p - m[None, :]), axis=0))
    per_sample = lse - jnp.sum(tgt_p, axis=0)
    loss = jnp.mean(per_sample[:B])               # CrossEntropyLoss 'mean'
    return logits, loss


def _reference(x, weight, label, *, scale, margin, easy_margin=False, ls_eps=0.0):
    """Plain-JAX reference mirroring the PyTorch module (sine clamped, as kernel)."""
    cos_m, sin_m = math.cos(margin), math.sin(margin)
    th = math.cos(math.pi - margin)
    mm = math.sin(math.pi - margin) * margin
    xn = x / jnp.maximum(jnp.linalg.norm(x, axis=1, keepdims=True), 1e-12)
    wn = weight / jnp.maximum(jnp.linalg.norm(weight, axis=1, keepdims=True), 1e-12)
    cosine = xn @ wn.T
    sine = jnp.sqrt(jnp.clip(1.0 - cosine ** 2, 0.0, 1.0))
    phi = cosine * cos_m - sine * sin_m
    phi = (jnp.where(cosine > 0, phi, cosine) if easy_margin
           else jnp.where(cosine > th, phi, cosine - mm))
    one_hot = jax.nn.one_hot(label, weight.shape[0], dtype=jnp.float32)
    if ls_eps > 0:
        one_hot = (1 - ls_eps) * one_hot + ls_eps / weight.shape[0]
    out = (one_hot * phi + (1.0 - one_hot) * cosine) * scale
    lse = jax.scipy.special.logsumexp(out, axis=1)
    tgt = jnp.take_along_axis(out, label[:, None], axis=1)[:, 0]
    return out, jnp.mean(lse - tgt)


if __name__ == "__main__":
    # Small deterministic shapes (production: fc_dim=768, classes=11014,
    # scale=30, margin=0.8, batch=16 -- scaled down for a quick test).
    B, D, C = 8, 32, 256
    scale, margin = 30.0, 0.8

    key = jax.random.PRNGKey(0)
    kx, kw, kl = jax.random.split(key, 3)

    x = jax.random.normal(kx, (B, D), dtype=jnp.float32)
    limit = math.sqrt(6.0 / (D + C))            # nn.init.xavier_uniform_
    weight = jax.random.uniform(kw, (C, D), minval=-limit, maxval=limit,
                                dtype=jnp.float32)
    label = jax.random.randint(kl, (B,), 0, C, dtype=jnp.int32)

    # 1) f32-operand path (exact check), ls_eps=0 specialized epilogue.
    logits, loss = arc_margin_product(x, weight, label, scale=scale,
                                      margin=margin, mxu_dtype=jnp.float32)
    jax.block_until_ready((logits, loss))
    ref_logits, ref_loss = _reference(x, weight, label, scale=scale, margin=margin)
    assert logits.shape == (B, C)
    assert jnp.allclose(logits, ref_logits, atol=2e-4, rtol=2e-4)
    assert jnp.allclose(loss, ref_loss, atol=2e-4, rtol=2e-4)

    # 2) Ragged B/C + label smoothing + 2 class shards + multiple batch tiles
    #    (also exercises the all-padding class tile with the finite mask).
    B2, C2 = 20, 300
    x2 = jax.random.normal(kx, (B2, D), dtype=jnp.float32)
    w2 = jax.random.uniform(kw, (C2, D), minval=-limit, maxval=limit,
                            dtype=jnp.float32)
    l2 = jax.random.randint(kl, (B2,), 0, C2, dtype=jnp.int32)
    lg2, ls2 = arc_margin_product(x2, w2, l2, scale=scale, margin=margin,
                                  ls_eps=0.1, mxu_dtype=jnp.float32,
                                  tb=8, tc=128, num_class_shards=2)
    jax.block_until_ready((lg2, ls2))
    rlg2, rls2 = _reference(x2, w2, l2, scale=scale, margin=margin, ls_eps=0.1)
    assert lg2.shape == (B2, C2)
    assert jnp.allclose(lg2, rlg2, atol=2e-4, rtol=2e-4)
    assert jnp.allclose(ls2, rls2, atol=2e-4, rtol=2e-4)

    # 3) easy_margin branch (f32, exact check).
    lg3, ls3 = arc_margin_product(x, weight, label, scale=scale, margin=margin,
                                  easy_margin=True, mxu_dtype=jnp.float32)
    jax.block_until_ready((lg3, ls3))
    rlg3, rls3 = _reference(x, weight, label, scale=scale, margin=margin,
                            easy_margin=True)
    assert jnp.allclose(lg3, rlg3, atol=2e-4, rtol=2e-4)
    assert jnp.allclose(ls3, rls3, atol=2e-4, rtol=2e-4)

    # 4) Default bf16-operand path (v5e/v6e/v7x fast path) -- loose smoke test:
    #    bf16 operands can flip the margin-threshold branch vs f32.
    lg4, ls4 = arc_margin_product(x, weight, label, scale=scale, margin=margin)
    jax.block_until_ready((lg4, ls4))
    assert bool(jnp.all(jnp.isfinite(lg4))) and bool(jnp.isfinite(ls4))

    # 5) Zero-wrapper-traffic fast path: bf16-stored weight + cached inv_w.
    w_bf16 = weight.astype(jnp.bfloat16)
    inv_w_cached = jax.lax.rsqrt(
        jnp.maximum(jnp.sum(weight.astype(jnp.float32) ** 2, axis=1), 1e-24))
    lg5, ls5 = arc_margin_product(x, w_bf16, label, scale=scale, margin=margin,
                                  inv_w=inv_w_cached)
    jax.block_until_ready((lg5, ls5))
    assert lg5.shape == (B, C)
    assert bool(jnp.all(jnp.isfinite(lg5))) and bool(jnp.isfinite(ls5))

    print("KERNEL_OK")
</pallas_src>

<mosaic_0001>
module attributes {stable_mosaic.version = 11 : i64} {
  func.func @_arcface_fused_kernel(%arg0: i32, %arg1: i32, %arg2: i32, %arg3: memref<8x1xi32, #tpu.memory_space<vmem>>, %arg4: memref<8x32xf32, #tpu.memory_space<vmem>>, %arg5: memref<256x32xf32, #tpu.memory_space<vmem>>, %arg6: memref<1x256xf32, #tpu.memory_space<vmem>>, %arg7: memref<8x256xf32, #tpu.memory_space<vmem>>, %arg8: memref<1x8x1xf32, #tpu.memory_space<vmem>>, %arg9: memref<1x8x1xf32, #tpu.memory_space<vmem>>, %arg10: memref<8x1xf32, #tpu.memory_space<vmem>>, %arg11: memref<8x1xf32, #tpu.memory_space<vmem>>, %arg12: memref<8x1xf32, #tpu.memory_space<vmem>>) attributes {dimension_semantics = [#tpu.dimension_semantics<parallel>, #tpu.dimension_semantics<parallel>, #tpu.dimension_semantics<arbitrary>], iteration_bounds = array<i64: 1, 1, 1>, scalar_prefetch = 0 : i64, scratch_operands = 3 : i64, tpu.core_type = #tpu.core_type<tc>, window_params = [{transform_indices = @transform_0, window_bounds = array<i64: 8, 1>}, {transform_indices = @transform_1, window_bounds = array<i64: 8, 32>}, {transform_indices = @transform_2, window_bounds = array<i64: 256, 32>}, {transform_indices = @transform_3, window_bounds = array<i64: 1, 256>}, {transform_indices = @transform_4, window_bounds = array<i64: 8, 256>}, {transform_indices = @transform_5, window_bounds = array<i64: 1, 8, 1>}, {transform_indices = @transform_6, window_bounds = array<i64: 1, 8, 1>}]} {
    %c1_i32 = arith.constant 1 : i32
    %0 = arith.muli %arg0, %c1_i32 : i32
    %1 = arith.addi %0, %arg2 : i32
    %c0_i32 = arith.constant 0 : i32
    %2 = arith.cmpi eq, %arg2, %c0_i32 : i32
    %3 = arith.extui %2 : i1 to i32
    %c0_i32_0 = arith.constant 0 : i32
    %4 = arith.cmpi ne, %3, %c0_i32_0 : i32
    scf.if %4 {
      %cst_44 = arith.constant 0xFF800000 : f32
      %85 = vector.broadcast %cst_44 : f32 to vector<8x1xf32>
      %c0_45 = arith.constant 0 : index
      %c0_46 = arith.constant 0 : index
      %86 = vector.load %arg10[%c0_45, %c0_46] : memref<8x1xf32, #tpu.memory_space<vmem>>, vector<8x1xf32>
      tpu.vector_store %arg10[%c0_45, %c0_46], %85 {strides = array<i32>} : memref<8x1xf32, #tpu.memory_space<vmem>>, vector<8x1xf32>,
      %cst_47 = arith.constant 0.000000e+00 : f32
      %87 = vector.broadcast %cst_47 : f32 to vector<8x1xf32>
      %c0_48 = arith.constant 0 : index
      %c0_49 = arith.constant 0 : index
      %88 = vector.load %arg11[%c0_48, %c0_49] : memref<8x1xf32, #tpu.memory_space<vmem>>, vector<8x1xf32>
      tpu.vector_store %arg11[%c0_48, %c0_49], %87 {strides = array<i32>} : memref<8x1xf32, #tpu.memory_space<vmem>>, vector<8x1xf32>,
      %cst_50 = arith.constant 0.000000e+00 : f32
      %89 = vector.broadcast %cst_50 : f32 to vector<8x1xf32>
      %c0_51 = arith.constant 0 : index
      %c0_52 = arith.constant 0 : index
      %90 = vector.load %arg12[%c0_51, %c0_52] : memref<8x1xf32, #tpu.memory_space<vmem>>, vector<8x1xf32>
      tpu.vector_store %arg12[%c0_51, %c0_52], %89 {strides = array<i32>} : memref<8x1xf32, #tpu.memory_space<vmem>>, vector<8x1xf32>,
    } else {
    }
    %c0 = arith.constant 0 : index
    %c0_1 = arith.constant 0 : index
    %5 = vector.load %arg4[%c0, %c0_1] : memref<8x32xf32, #tpu.memory_space<vmem>>, vector<8x32xf32>
    %c0_2 = arith.constant 0 : index
    %c0_3 = arith.constant 0 : index
    %6 = vector.load %arg5[%c0_2, %c0_3] : memref<256x32xf32, #tpu.memory_space<vmem>>, vector<256x32xf32>
    %cst = arith.constant dense<0.000000e+00> : vector<8x256xf32>
    %7 = tpu.matmul %5, %6, %cst {dimension_numbers = #tpu.dot_dimension_numbers<[1], [1], [0], [0], [0, 0, 1, 0], [], []>} : vector<8x32xf32>, vector<256x32xf32>, vector<8x256xf32> -> vector<8x256xf32>
    %c0_4 = arith.constant 0 : index
    %c0_5 = arith.constant 0 : index
    %8 = vector.load %arg6[%c0_4, %c0_5] : memref<1x256xf32, #tpu.memory_space<vmem>>, vector<1x256xf32>
    %9 = vector.broadcast %8 : vector<1x256xf32> to vector<8x256xf32>
    %10 = arith.mulf %7, %9 : vector<8x256xf32>
    %c0_6 = arith.constant 0 : index
    %c0_7 = arith.constant 0 : index
    %11 = vector.load %arg3[%c0_6, %c0_7] : memref<8x1xi32, #tpu.memory_space<vmem>>, vector<8x1xi32>
    %c256_i32 = arith.constant 256 : i32
    %12 = arith.muli %1, %c256_i32 : i32
    %13 = tpu.iota {dimensions = array<i32: 1>} : vector<8x256xi32>
    %14 = vector.broadcast %12 : i32 to vector<8x256xi32>
    %15 = arith.addi %14, %13 : vector<8x256xi32>
    %16 = vector.broadcast %11 : vector<8x1xi32> to vector<8x256xi32>
    %17 = arith.cmpi eq, %15, %16 : vector<8x256xi32>
    %cst_8 = arith.constant 0.000000e+00 : f32
    %18 = vector.broadcast %cst_8 : f32 to vector<8x256xf32>
    %19 = arith.select %17, %10, %18 : vector<8x256xi1>, vector<8x256xf32>
    %cst_9 = arith.constant dense<0.000000e+00> : vector<8xf32>
    %20 = vector.multi_reduction <add>, %19, %cst_9 [1] : vector<8x256xf32> to vector<8xf32>
    %21 = vector.shape_cast %20 : vector<8xf32> to vector<8x1xf32>
    %22 = arith.mulf %21, %21 : vector<8x1xf32>
    %cst_10 = arith.constant 1.000000e+00 : f32
    %23 = vector.broadcast %cst_10 : f32 to vector<8x1xf32>
    %24 = arith.subf %23, %22 : vector<8x1xf32>
    %cst_11 = arith.constant 0.000000e+00 : f32
    %cst_12 = arith.constant 1.000000e+00 : f32
    %25 = vector.broadcast %cst_11 : f32 to vector<8x1xf32>
    %26 = arith.maximumf %25, %24 : vector<8x1xf32>
    %27 = vector.broadcast %cst_12 : f32 to vector<8x1xf32>
    %28 = arith.minimumf %27, %26 : vector<8x1xf32>
    %29 = math.sqrt %28 : vector<8x1xf32>
    %cst_13 = arith.constant 0.696706712 : f32
    %30 = vector.broadcast %cst_13 : f32 to vector<8x1xf32>
    %31 = arith.mulf %21, %30 : vector<8x1xf32>
    %cst_14 = arith.constant 0.717356086 : f32
    %32 = vector.broadcast %cst_14 : f32 to vector<8x1xf32>
    %33 = arith.mulf %29, %32 : vector<8x1xf32>
    %34 = arith.subf %31, %33 : vector<8x1xf32>
    %cst_15 = arith.constant -0.696706712 : f32
    %35 = vector.broadcast %cst_15 : f32 to vector<8x1xf32>
    %36 = arith.cmpf ogt, %21, %35 : vector<8x1xf32>
    %cst_16 = arith.constant 0.573884845 : f32
    %37 = vector.broadcast %cst_16 : f32 to vector<8x1xf32>
    %38 = arith.subf %21, %37 : vector<8x1xf32>
    %39 = arith.select %36, %34, %38 : vector<8x1xi1>, vector<8x1xf32>
    %40 = arith.subf %39, %21 : vector<8x1xf32>
    %cst_17 = arith.constant 3.000000e+01 : f32
    %41 = vector.broadcast %cst_17 : f32 to vector<8x1xf32>
    %42 = arith.mulf %40, %41 : vector<8x1xf32>
    %cst_18 = arith.constant 3.000000e+01 : f32
    %43 = vector.broadcast %cst_18 : f32 to vector<8x256xf32>
    %44 = arith.mulf %10, %43 : vector<8x256xf32>
    %cst_19 = arith.constant 0.000000e+00 : f32
    %45 = vector.shape_cast %42 : vector<8x1xf32> to vector<8x1xf32>
    %46 = vector.broadcast %45 : vector<8x1xf32> to vector<8x256xf32>
    %47 = vector.broadcast %cst_19 : f32 to vector<8x256xf32>
    %48 = arith.select %17, %46, %47 : vector<8x256xi1>, vector<8x256xf32>
    %49 = arith.addf %44, %48 : vector<8x256xf32>
    %c256_i32_20 = arith.constant 256 : i32
    %50 = arith.muli %1, %c256_i32_20 : i32
    %51 = vector.broadcast %50 : i32 to vector<8x1xi32>
    %52 = arith.cmpi sge, %11, %51 : vector<8x1xi32>
    %c256_i32_21 = arith.constant 256 : i32
    %53 = arith.addi %50, %c256_i32_21 : i32
    %54 = vector.broadcast %53 : i32 to vector<8x1xi32>
    %55 = arith.cmpi slt, %11, %54 : vector<8x1xi32>
    %56 = arith.andi %52, %55 : vector<8x1xi1>
    %c0_22 = arith.constant 0 : index
    %c0_23 = arith.constant 0 : index
    %57 = vector.load %arg12[%c0_22, %c0_23] : memref<8x1xf32, #tpu.memory_space<vmem>>, vector<8x1xf32>
    %cst_24 = arith.constant 3.000000e+01 : f32
    %58 = vector.broadcast %cst_24 : f32 to vector<8x1xf32>
    %59 = arith.mulf %39, %58 : vector<8x1xf32>
    %cst_25 = arith.constant 0.000000e+00 : f32
    %60 = vector.broadcast %cst_25 : f32 to vector<8x1xf32>
    %61 = arith.select %56, %59, %60 : vector<8x1xi1>, vector<8x1xf32>
    %62 = arith.addf %57, %61 : vector<8x1xf32>
    %c0_26 = arith.constant 0 : index
    %c0_27 = arith.constant 0 : index
    %63 = vector.load %arg12[%c0_26, %c0_27] : memref<8x1xf32, #tpu.memory_space<vmem>>, vector<8x1xf32>
    tpu.vector_store %arg12[%c0_26, %c0_27], %62 {strides = array<i32>} : memref<8x1xf32, #tpu.memory_space<vmem>>, vector<8x1xf32>,
    %c0_28 = arith.constant 0 : index
    %c0_29 = arith.constant 0 : index
    %64 = vector.load %arg7[%c0_28, %c0_29] : memref<8x256xf32, #tpu.memory_space<vmem>>, vector<8x256xf32>
    tpu.vector_store %arg7[%c0_28, %c0_29], %49 {strides = array<i32>} : memref<8x256xf32, #tpu.memory_space<vmem>>, vector<8x256xf32>,
    %c0_30 = arith.constant 0 : index
    %c0_31 = arith.constant 0 : index
    %65 = vector.load %arg10[%c0_30, %c0_31] : memref<8x1xf32, #tpu.memory_space<vmem>>, vector<8x1xf32>
    %cst_32 = arith.constant dense<0xFF800000> : vector<8xf32>
    %66 = vector.multi_reduction <maximumf>, %49, %cst_32 [1] : vector<8x256xf32> to vector<8xf32>
    %67 = vector.shape_cast %66 : vector<8xf32> to vector<8x1xf32>
    %68 = arith.maximumf %65, %67 : vector<8x1xf32>
    %c0_33 = arith.constant 0 : index
    %c0_34 = arith.constant 0 : index
    %69 = vector.load %arg10[%c0_33, %c0_34] : memref<8x1xf32, #tpu.memory_space<vmem>>, vector<8x1xf32>
    %70 = arith.subf %69, %68 : vector<8x1xf32>
    %71 = math.exp %70 : vector<8x1xf32>
    %c0_35 = arith.constant 0 : index
    %c0_36 = arith.constant 0 : index
    %72 = vector.load %arg11[%c0_35, %c0_36] : memref<8x1xf32, #tpu.memory_space<vmem>>, vector<8x1xf32>
    %73 = arith.mulf %71, %72 : vector<8x1xf32>
    %74 = vector.broadcast %68 : vector<8x1xf32> to vector<8x256xf32>
    %75 = arith.subf %49, %74 : vector<8x256xf32>
    %76 = math.exp %75 : vector<8x256xf32>
    %cst_37 = arith.constant dense<0.000000e+00> : vector<8xf32>
    %77 = vector.multi_reduction <add>, %76, %cst_37 [1] : vector<8x256xf32> to vector<8xf32>
    %78 = vector.shape_cast %77 : vector<8xf32> to vector<8x1xf32>
    %79 = arith.addf %73, %78 : vector<8x1xf32>
    %c0_38 = arith.constant 0 : index
    %c0_39 = arith.constant 0 : index
    %80 = vector.load %arg11[%c0_38, %c0_39] : memref<8x1xf32, #tpu.memory_space<vmem>>, vector<8x1xf32>
    tpu.vector_store %arg11[%c0_38, %c0_39], %79 {strides = array<i32>} : memref<8x1xf32, #tpu.memory_space<vmem>>, vector<8x1xf32>,
    %c0_40 = arith.constant 0 : index
    %c0_41 = arith.constant 0 : index
    %81 = vector.load %arg10[%c0_40, %c0_41] : memref<8x1xf32, #tpu.memory_space<vmem>>, vector<8x1xf32>
    tpu.vector_store %arg10[%c0_40, %c0_41], %68 {strides = array<i32>} : memref<8x1xf32, #tpu.memory_space<vmem>>, vector<8x1xf32>,
    %c0_i32_42 = arith.constant 0 : i32
    %82 = arith.cmpi eq, %arg2, %c0_i32_42 : i32
    %83 = arith.extui %82 : i1 to i32
    %c0_i32_43 = arith.constant 0 : i32
    %84 = arith.cmpi ne, %83, %c0_i32_43 : i32
    scf.if %84 {
      %c0_44 = arith.constant 0 : index
      %c0_45 = arith.constant 0 : index
      %85 = vector.load %arg10[%c0_44, %c0_45] : memref<8x1xf32, #tpu.memory_space<vmem>>, vector<8x1xf32>
      %c0_46 = arith.constant 0 : index
      %c0_47 = arith.constant 0 : index
      %86 = vector.load %arg11[%c0_46, %c0_47] : memref<8x1xf32, #tpu.memory_space<vmem>>, vector<8x1xf32>
      %87 = math.log %86 : vector<8x1xf32>
      %88 = arith.addf %85, %87 : vector<8x1xf32>
      %c0_48 = arith.constant 0 : index
      %c0_49 = arith.constant 0 : index
      %c0_50 = arith.constant 0 : index
      %89 = vector.load %arg8[%c0_48, %c0_49, %c0_50] : memref<1x8x1xf32, #tpu.memory_space<vmem>>, vector<1x8x1xf32>
      %90 = vector.shape_cast %89 : vector<1x8x1xf32> to vector<8x1xf32>
      %91 = vector.shape_cast %88 : vector<8x1xf32> to vector<1x8x1xf32>
      tpu.vector_store %arg8[%c0_48, %c0_49, %c0_50], %91 {strides = array<i32>} : memref<1x8x1xf32, #tpu.memory_space<vmem>>, vector<1x8x1xf32>,
      %c0_51 = arith.constant 0 : index
      %c0_52 = arith.constant 0 : index
      %92 = vector.load %arg12[%c0_51, %c0_52] : memref<8x1xf32, #tpu.memory_space<vmem>>, vector<8x1xf32>
      %c0_53 = arith.constant 0 : index
      %c0_54 = arith.constant 0 : index
      %c0_55 = arith.constant 0 : index
      %93 = vector.load %arg9[%c0_53, %c0_54, %c0_55] : memref<1x8x1xf32, #tpu.memory_space<vmem>>, vector<1x8x1xf32>
      %94 = vector.shape_cast %93 : vector<1x8x1xf32> to vector<8x1xf32>
      %95 = vector.shape_cast %92 : vector<8x1xf32> to vector<1x8x1xf32>
      tpu.vector_store %arg9[%c0_53, %c0_54, %c0_55], %95 {strides = array<i32>} : memref<1x8x1xf32, #tpu.memory_space<vmem>>, vector<1x8x1xf32>,
    } else {
    }
    return
  }
  func.func @transform_0(%arg0: i32, %arg1: i32, %arg2: i32) -> (i32, i32) {
    %c0_i32 = arith.constant 0 : i32
    %c0_i32_0 = arith.constant 0 : i32
    return %arg1, %c0_i32 : i32, i32
  }
  func.func @transform_1(%arg0: i32, %arg1: i32, %arg2: i32) -> (i32, i32) {
    %c0_i32 = arith.constant 0 : i32
    %c0_i32_0 = arith.constant 0 : i32
    return %arg1, %c0_i32 : i32, i32
  }
  func.func @transform_2(%arg0: i32, %arg1: i32, %arg2: i32) -> (i32, i32) {
    %c1_i32 = arith.constant 1 : i32
    %0 = arith.muli %arg0, %c1_i32 : i32
    %1 = arith.addi %0, %arg2 : i32
    %c0_i32 = arith.constant 0 : i32
    %c0_i32_0 = arith.constant 0 : i32
    return %1, %c0_i32 : i32, i32
  }
  func.func @transform_3(%arg0: i32, %arg1: i32, %arg2: i32) -> (i32, i32) {
    %c1_i32 = arith.constant 1 : i32
    %0 = arith.muli %arg0, %c1_i32 : i32
    %1 = arith.addi %0, %arg2 : i32
    %c0_i32 = arith.constant 0 : i32
    %c0_i32_0 = arith.constant 0 : i32
    return %c0_i32, %1 : i32, i32
  }
  func.func @transform_4(%arg0: i32, %arg1: i32, %arg2: i32) -> (i32, i32) {
    %c1_i32 = arith.constant 1 : i32
    %0 = arith.muli %arg0, %c1_i32 : i32
    %1 = arith.addi %0, %arg2 : i32
    %c0_i32 = arith.constant 0 : i32
    return %arg1, %1 : i32, i32
  }
  func.func @transform_5(%arg0: i32, %arg1: i32, %arg2: i32) -> (i32, i32, i32) {
    %c0_i32 = arith.constant 0 : i32
    %c0_i32_0 = arith.constant 0 : i32
    return %arg0, %arg1, %c0_i32 : i32, i32, i32
  }
  func.func @transform_6(%arg0: i32, %arg1: i32, %arg2: i32) -> (i32, i32, i32) {
    %c0_i32 = arith.constant 0 : i32
    %c0_i32_0 = arith.constant 0 : i32
    return %arg0, %arg1, %c0_i32 : i32, i32, i32
  }
}

</mosaic_0001>

<llo_original>
// kernel: tpu_custom_call.1
$region0: #{tpu_custom_call.1}
  #allocation0 [shape = 'u32[]', space=smem, size = 0x4, offset = 0x4, fixed_abs, tag = 'smem constant byte address 0x4 - core index']
  #allocation1 [shape = 'u32[144,128]{1,0:T(1,128)}', space=vmem, size = 0x12000, scoped, tag = 'internal scratch']
  #allocation2 [shape = 'f32[8,1]{1,0:T(8,128)}', space=vmem, size = 0x1000, scoped, tag = 'scratch operand']
  #allocation3 [shape = 'f32[8,1]{1,0:T(8,128)}', space=vmem, size = 0x1000, scoped, tag = 'scratch operand']
  #allocation4 [shape = 'f32[8,1]{1,0:T(8,128)}', space=vmem, size = 0x1000, scoped, tag = 'scratch operand']
  %s0 = inlined_call_operand.vmem [shape: s32[8,1], index: 0, kind: input, shape index: {}]
  %s1 = inlined_call_operand.vmem [shape: f32[8,32], index: 1, kind: input, shape index: {}]
  %s2 = inlined_call_operand.vmem [shape: f32[256,32], index: 2, kind: input, shape index: {}]
  %s3 = inlined_call_operand.vmem [shape: f32[1,256], index: 3, kind: input, shape index: {}]
  %s4 = inlined_call_operand.hbm [shape: f32[8,256], index: 4, kind: output, shape index: {0}]
  %s5 = inlined_call_operand.vmem [shape: f32[1,8,1], index: 5, kind: output, shape index: {1}]
  %s6 = inlined_call_operand.vmem [shape: f32[1,8,1], index: 6, kind: output, shape index: {2}]
  %7 = xla_tuple %s4, %s5, %s6
  %s8 = sld [smem:[#allocation0]]
  $region50: #{tpu_custom_call.1} parent=0
    _
  %s10 = ssub.s32 1, %s8
  %s11 = scalar_select 0, %s10, %s8
  $region1: #{tpu_custom_call.1} parent=0
    #allocation5 [shape = 'u8[8192]{0}', space=vmem, size = 0x2000, scoped, tag = 'output window, operand 0, single buffered']
    #allocation6 [shape = 's32[1]{0}', space=sflag, size = 0x4, scoped, tag = 'scoped memory for tpu_custom_call.1']
    %12 = vsyncpa [#allocation6], 0
    // Predicated region
    $region2: #{tpu_custom_call.1} parent=1 // pred_check
      _
    $region3: #{tpu_custom_call.1} parent=1 // pred_check_branch
      %14 = sbr.rel (0) target = $region5
    $region4: #{tpu_custom_call.1} parent=1 // pred_region
      _
    $region5: #{tpu_custom_call.1} parent=1 // pred_fallthru
      _
    // Predicated region
    $region6: #{tpu_custom_call.1} parent=1 // pred_check
      _
    $region7: #{tpu_custom_call.1} parent=1 // pred_check_branch
      %16 = sbr.rel (0) target = $region9
    $region8: #{tpu_custom_call.1} parent=1 // pred_region
      _
    $region9: #{tpu_custom_call.1} parent=1 // pred_fallthru
      _
    // Predicated region
    $region10: #{tpu_custom_call.1} parent=1 // pred_check
      _
    $region11: #{tpu_custom_call.1} parent=1 // pred_check_branch
      %18 = sbr.rel (0) target = $region13
    $region12: #{tpu_custom_call.1} parent=1 // pred_region
      %s19 = sadd.s32 0, 0
      %s20 = smul.u32 32, %s19
      %p21 = scmp.lt.s32.totalorder %s20, 31
      %s22 = scalar_select %p21, %s20, 31
      %s23 = smul.addr %s22, 8
      %s24 = scalar_lea.vmem %s2, %s23
      %s25 = sadd.s32 0, 0
      %s26 = smul.u32 32, %s25
    $region13: #{tpu_custom_call.1} parent=1 // pred_fallthru
      _
    // Predicated region
    $region14: #{tpu_custom_call.1} parent=1 // pred_check
      _
    $region15: #{tpu_custom_call.1} parent=1 // pred_check_branch
      %28 = sbr.rel (0) target = $region17
    $region16: #{tpu_custom_call.1} parent=1 // pred_region
      %s29 = sadd.s32 0, 0
      %s30 = smul.u32 2, %s29
      %p31 = scmp.lt.s32.totalorder %s30, 1
      %s32 = scalar_select %p31, %s30, 1
      %s33 = scalar_lea.vmem %s3, %s32
      %s34 = sadd.s32 0, 0
      %s35 = smul.u32 2, %s34
    $region17: #{tpu_custom_call.1} parent=1 // pred_fallthru
      _
    %s36 = sadd.s32 0, 0
    %s37 = smul.u32 32, %s36
    %p38 = scmp.lt.s32.totalorder %s37, 31
    %s39 = scalar_select %p38, %s37, 31
    %s40 = smul.addr %s39, 8
    %s41 = scalar_lea.vmem %s2, %s40
    %s42 = sadd.s32 0, 0
    %s43 = smul.u32 2, %s42
    %p44 = scmp.lt.s32.totalorder %s43, 1
    %s45 = scalar_select %p44, %s43, 1
    %s46 = scalar_lea.vmem %s3, %s45
    %s47 = sadd.s32 0, 0
    %s48 = smul.u32 32, %s47
    %p49 = scmp.lt.s32.totalorder %s48, 31
    %s50 = scalar_select %p49, %s48, 31
    %s51 = smul.addr %s50, 8
    %s52 = scalar_lea.vmem %s2, %s51
    %s53 = sadd.s32 0, 0
    %s54 = smul.u32 32, %s53
    %s55 = sadd.s32 0, 0
    %s56 = smul.u32 2, %s55
    %p57 = scmp.lt.s32.totalorder %s56, 1
    %s58 = scalar_select %p57, %s56, 1
    %s59 = scalar_lea.vmem %s3, %s58
    %s60 = sadd.s32 0, 0
    %s61 = smul.u32 2, %s60
    %s62 = sadd.s32 0, 0
    %s63 = smul.u32 2, %s62
    %s64 = sadd.s32 0, 0
    %p65 = scmp.eq.s32.totalorder 0, 0
    // Predicated region
    $region18: #{tpu_custom_call.1} parent=1 // pred_check
      %p66 = pneg %p65
    $region19: #{tpu_custom_call.1} parent=1 // pred_check_branch
      %68 = sbr.rel (%p66) target = $region21
    $region20: #{tpu_custom_call.1} parent=1 // pred_region
      %vm69 = vcmask 7168
      %70 = vst.msk [vmem:[#allocation2] sm:$0xff] %vm69, -inf
      %71 = vst.msk [vmem:[#allocation3] sm:$0xff] %vm69, 0.0
      %72 = vst.msk [vmem:[#allocation4] sm:$0xff] %vm69, 0.0
    $region21: #{tpu_custom_call.1} parent=1 // pred_fallthru
      _
    %v73 = vld [vmem:[%s1] sm:$0xff]
    %v74 = vld [vmem:[%s52] sm:$0xff]
    %v75 = vld [vmem:[%s52 + $0x8] sm:$0xff]
    %v76 = vld [vmem:[%s52 + $0x10] sm:$0xff]
    %v77 = vld [vmem:[%s52 + $0x18] sm:$0xff]
    %v78 = vld [vmem:[%s52 + $0x20] sm:$0xff]
    %v79 = vld [vmem:[%s52 + $0x28] sm:$0xff]
    %v80 = vld [vmem:[%s52 + $0x30] sm:$0xff]
    %v81 = vld [vmem:[%s52 + $0x38] sm:$0xff]
    %v82 = vld [vmem:[%s52 + $0x40] sm:$0xff]
    %v83 = vld [vmem:[%s52 + $0x48] sm:$0xff]
    %v84 = vld [vmem:[%s52 + $0x50] sm:$0xff]
    %v85 = vld [vmem:[%s52 + $0x58] sm:$0xff]
    %v86 = vld [vmem:[%s52 + $0x60] sm:$0xff]
    %v87 = vld [vmem:[%s52 + $0x68] sm:$0xff]
    %v88 = vld [vmem:[%s52 + $0x70] sm:$0xff]
    %v89 = vld [vmem:[%s52 + $0x78] sm:$0xff]
    %v90 = vld [vmem:[%s52 + $0x80] sm:$0xff]
    %v91 = vld [vmem:[%s52 + $0x88] sm:$0xff]
    %v92 = vld [vmem:[%s52 + $0x90] sm:$0xff]
    %v93 = vld [vmem:[%s52 + $0x98] sm:$0xff]
    %v94 = vld [vmem:[%s52 + $0xa0] sm:$0xff]
    %v95 = vld [vmem:[%s52 + $0xa8] sm:$0xff]
    %v96 = vld [vmem:[%s52 + $0xb0] sm:$0xff]
    %v97 = vld [vmem:[%s52 + $0xb8] sm:$0xff]
    %v98 = vld [vmem:[%s52 + $0xc0] sm:$0xff]
    %v99 = vld [vmem:[%s52 + $0xc8] sm:$0xff]
    %v100 = vld [vmem:[%s52 + $0xd0] sm:$0xff]
    %v101 = vld [vmem:[%s52 + $0xd8] sm:$0xff]
    %v102 = vld [vmem:[%s52 + $0xe0] sm:$0xff]
    %v103 = vld [vmem:[%s52 + $0xe8] sm:$0xff]
    %v104 = vld [vmem:[%s52 + $0xf0] sm:$0xff]
    %v105 = vld [vmem:[%s52 + $0xf8] sm:$0xff]
    %vm106 = vcmask 261120
    %v108 = vsel %vm106, %v73, 0
    %v111 = vsel %vm106, %v74, 0
    %v114 = vsel %vm106, %v75, 0
    %v117 = vsel %vm106, %v76, 0
    %v120 = vsel %vm106, %v77, 0
    %v123 = vsel %vm106, %v78, 0
    %v126 = vsel %vm106, %v79, 0
    %v129 = vsel %vm106, %v80, 0
    %v132 = vsel %vm106, %v81, 0
    %v135 = vsel %vm106, %v82, 0
    %v138 = vsel %vm106, %v83, 0
    %v141 = vsel %vm106, %v84, 0
    %v144 = vsel %vm106, %v85, 0
    %v147 = vsel %vm106, %v86, 0
    %v150 = vsel %vm106, %v87, 0
    %v153 = vsel %vm106, %v88, 0
    %v156 = vsel %vm106, %v89, 0
    %v159 = vsel %vm106, %v90, 0
    %v162 = vsel %vm106, %v91, 0
    %v165 = vsel %vm106, %v92, 0
    %v168 = vsel %vm106, %v93, 0
    %v171 = vsel %vm106, %v94, 0
    %v174 = vsel %vm106, %v95, 0
    %v177 = vsel %vm106, %v96, 0
    %v180 = vsel %vm106, %v97, 0
    %v183 = vsel %vm106, %v98, 0
    %v186 = vsel %vm106, %v99, 0
    %v189 = vsel %vm106, %v100, 0
    %v192 = vsel %vm106, %v101, 0
    %v195 = vsel %vm106, %v102, 0
    %v198 = vsel %vm106, %v103, 0
    %v201 = vsel %vm106, %v104, 0
    %v204 = vsel %vm106, %v105, 0
    %206 = vmatprep.subr.mxu0 0.0
    %207 = vmatpush1.xpose.msra.mxu0 %v111
    %208 = vmatprep.subr.mxu0 0.0
    %209 = vmatpush1.xpose.msra.mxu0 %v114
    %210 = vmatprep.subr.mxu0 0.0
    %211 = vmatpush1.xpose.msra.mxu0 %v117
    %212 = vmatprep.subr.mxu0 0.0
    %213 = vmatpush1.xpose.msra.mxu0 %v120
    %214 = vmatprep.subr.mxu0 0.0
    %215 = vmatpush1.xpose.msra.mxu0 %v123
    %216 = vmatprep.subr.mxu0 0.0
    %217 = vmatpush1.xpose.msra.mxu0 %v126
    %218 = vmatprep.subr.mxu0 0.0
    %219 = vmatpush1.xpose.msra.mxu0 %v129
    %220 = vmatprep.subr.mxu0 0.0
    %221 = vmatpush1.xpose.msra.mxu0 %v132
    %222 = vmatprep.subr.mxu0 0.0
    %223 = vmatpush1.xpose.msra.mxu0 %v135
    %224 = vmatprep.subr.mxu0 0.0
    %225 = vmatpush1.xpose.msra.mxu0 %v138
    %226 = vmatprep.subr.mxu0 0.0
    %227 = vmatpush1.xpose.msra.mxu0 %v141
    %228 = vmatprep.subr.mxu0 0.0
    %229 = vmatpush1.xpose.msra.mxu0 %v144
    %230 = vmatprep.subr.mxu0 0.0
    %231 = vmatpush1.xpose.msra.mxu0 %v147
    %232 = vmatprep.subr.mxu0 0.0
    %233 = vmatpush1.xpose.msra.mxu0 %v150
    %234 = vmatprep.subr.mxu0 0.0
    %235 = vmatpush1.xpose.msra.mxu0 %v153
    %236 = vmatprep.subr.mxu0 0.0
    %237 = vmatpush1.xpose.msra.mxu0 %v156
    %238 = vmatprep.subr.mxu0 0.0
    %239 = vmatpush1.xpose.msra.mxu0 %v159
    %240 = vmatprep.subr.mxu0 0.0
    %241 = vmatpush1.xpose.msra.mxu0 %v162
    %242 = vmatprep.subr.mxu0 0.0
    %243 = vmatpush1.xpose.msra.mxu0 %v165
    %244 = vmatprep.subr.mxu0 0.0
    %245 = vmatpush1.xpose.msra.mxu0 %v168
    %246 = vmatprep.subr.mxu0 0.0
    %247 = vmatpush1.xpose.msra.mxu0 %v171
    %248 = vmatprep.subr.mxu0 0.0
    %249 = vmatpush1.xpose.msra.mxu0 %v174
    %250 = vmatprep.subr.mxu0 0.0
    %251 = vmatpush1.xpose.msra.mxu0 %v177
    %252 = vmatprep.subr.mxu0 0.0
    %253 = vmatpush1.xpose.msra.mxu0 %v180
    %254 = vmatprep.subr.mxu0 0.0
    %255 = vmatpush1.xpose.msra.mxu0 %v183
    %256 = vmatprep.subr.mxu0 0.0
    %257 = vmatpush1.xpose.msra.mxu0 %v186
    %258 = vmatprep.subr.mxu0 0.0
    %259 = vmatpush1.xpose.msra.mxu0 %v189
    %260 = vmatprep.subr.mxu0 0.0
    %261 = vmatpush1.xpose.msra.mxu0 %v192
    %262 = vmatprep.subr.mxu0 0.0
    %263 = vmatpush1.xpose.msra.mxu0 %v195
    %264 = vmatprep.subr.mxu0 0.0
    %265 = vmatpush1.xpose.msra.mxu0 %v198
    %266 = vmatprep.subr.mxu0 0.0
    %267 = vmatpush1.xpose.msra.mxu0 %v201
    %268 = vmatprep.subr.mxu0 0.0
    %269 = vmatpush1.xpose.msra.mxu0 %v204
    %270 = vmatprep.mubr.f32.mxu0 0.0
    %271 = vmatmul.mubr.f32.gmra.mrb[0].mxu0 %v108
    %v272 = vpop.f32.mrb[0].mxu0
    %v273 = vadd.f32 0.0, %v272
    %v274 = vpop.f32.mrb[0].mxu0
    %v275 = vadd.f32 0.0, %v274
    %276 = vdwg.mxu0
    %v277 = vld [vmem:[%s59] sm:$0x3]
    %v279 = vlaneseq
    %v280 = vshrl.u32 %v279, 7
    %v281 = vsub.s32 0, %v280
    %v282 = vrot.slane %v277, %v281
    %v283 = vlaneseq
    %v284 = vshrl.u32 %v283, 7
    %v285 = vsub.s32 1, %v284
    %v286 = vrot.slane %v277, %v285
    %v289 = vmul.f32 %v273, %v282
    %v290 = vmul.f32 %v275, %v286
    %v291 = vld [vmem:[%s0] sm:$0xff]
    %s292 = smul.u32 %s64, 256
    %v293 = vlaneseq
    %v294 = vand.u32 %v293, 127
    %v295 = vadd.s32 %v294, 128
    %v296 = vstv %s292
    %v297 = vadd.s32 %v296, %v294
    %v298 = vadd.s32 %v296, %v295
    %299 = vset.pattern.permute.xlu0 0
    %300 = vperm.xlu0 %299, %v291
    %v301 = vpop.permute.xlu0 %300
    %vm302 = vcmp.eq.s32.totalorder %v297, %v301
    %vm303 = vcmp.eq.s32.totalorder %v298, %v301
    %v304 = vsel %vm302, %v289, 0.0
    %v305 = vsel %vm303, %v290, 0.0
    %v306 = vadd.f32 %v304, %v305
    %307 = vadd.xlane.f32.xlu0 %v306
    %v308 = vpop.xlane.xlu0 %307
    %v309 = vmul.f32 %v308, %v308
    %v310 = vsub.f32 1.0, %v309
    %v311 = vmax.f32 %v310, 0.0
    %v312 = vmin.f32 %v311, 1.0
    %v313 = vrsqrt.pop %v312
    %v314 = vmul.f32 %v312, %v313
    %vm315 = vcmp.eq.f32.partialorder %v312, inf
    %v316 = vsel %vm315, %v312, %v314
    %vm317 = vcmp.eq.f32.partialorder %v312, 0.0
    %v318 = vand.u32 %v312, 2147483648
    %v319 = vsel %vm317, %v318, %v316
    %v320 = vmul.f32 %v308, 0.6967067
    %v321 = vmul.f32 %v319, 0.7173561
    %v322 = vsub.f32 %v320, %v321
    %vm323 = vcmp.gt.f32.partialorder %v308, -0.6967067
    %v324 = vsub.f32 %v308, 0.57388484
    %v325 = vsel %vm323, %v322, %v324
    %v326 = vsub.f32 %v325, %v308
    %v327 = vmul.f32 %v326, 30.0
    %v328 = vmul.f32 %v289, 30.0
    %v329 = vmul.f32 %v290, 30.0
    %v330 = vsel %vm302, %v327, 0.0
    %v331 = vsel %vm303, %v327, 0.0
    %v332 = vadd.f32 %v328, %v330
    %v333 = vadd.f32 %v329, %v331
    %vm334 = vcmp.ge.s32.totalorder %v291, %v296
    %s335 = sadd.s32 %s292, 256
    %v336 = vstv %s335
    %vm337 = vcmp.lt.s32.totalorder %v291, %v336
    %vm338 = vmand %vm334, %vm337
    %v339 = vld [vmem:[#allocation4] sm:$0xff]
    %v340 = vmul.f32 %v325, 30.0
    %v341 = vsel %vm338, %v340, 0.0
    %v342 = vadd.f32 %v339, %v341
    %vm343 = vcmask 7168
    %344 = vst.msk [vmem:[#allocation4] sm:$0xff] %vm343, %v342
    %345 = vst [vmem:[#allocation5] sm:$0xff] %v332
    %346 = vst [vmem:[#allocation5 + $0x8] sm:$0xff] %v333
    %v347 = vld [vmem:[#allocation2] sm:$0xff]
    %v348 = vmax.f32 %v332, %v333
    %349 = vmax.xlane.f32.xlu0 %v348
    %v350 = vpop.xlane.xlu0 %349
    %v351 = vmax.f32 %v347, %v350
    %v352 = vsub.f32 %v347, %v351
    %v353 = vmul.f32 %v352, 1.442695
    %v354 = vpow.pop %v353
    %v355 = vld [vmem:[#allocation3] sm:$0xff]
    %v356 = vmul.f32 %v354, %v355
    %358 = vset.pattern.permute.xlu0 0
    %359 = vperm.xlu0 %358, %v351
    %v360 = vpop.permute.xlu0 %359
    %v362 = vsub.f32 %v332, %v360
    %v363 = vsub.f32 %v333, %v360
    %v364 = vmul.f32 %v362, 1.442695
    %v365 = vpow.pop %v364
    %v366 = vmul.f32 %v363, 1.442695
    %v367 = vpow.pop %v366
    %v368 = vadd.f32 %v365, %v367
    %369 = vadd.xlane.f32.xlu0 %v368
    %v370 = vpop.xlane.xlu0 %369
    %v371 = vadd.f32 %v356, %v370
    %372 = vst.msk [vmem:[#allocation3] sm:$0xff] %vm343, %v371
    %373 = vst.msk [vmem:[#allocation2] sm:$0xff] %vm343, %v351
    // Predicated region
    $region22: #{tpu_custom_call.1} parent=1 // pred_check
      %p374 = pneg %p65
    $region23: #{tpu_custom_call.1} parent=1 // pred_check_branch
      %376 = sbr.rel (%p374) target = $region25
    $region24: #{tpu_custom_call.1} parent=1 // pred_region
      %v377 = vld [vmem:[#allocation2] sm:$0xff]
      %v378 = vld [vmem:[#allocation3] sm:$0xff]
      %v379 = vlog2.pop %v378
      %v380 = vmul.f32 %v379, 0.6931472
      %v381 = vadd.f32 %v377, %v380
      %382 = vst.msk [vmem:[%s5] sm:$0xff] %vm343, %v381
      %v383 = vld [vmem:[#allocation4] sm:$0xff]
      %384 = vst.msk [vmem:[%s6] sm:$0xff] %vm343, %v383
    $region25: #{tpu_custom_call.1} parent=1 // pred_fallthru
      _
    // Predicated region
    $region26: #{tpu_custom_call.1} parent=1 // pred_check
      _
    $region27: #{tpu_custom_call.1} parent=1 // pred_check_branch
      %386 = sbr.rel (0) target = $region29
    $region28: #{tpu_custom_call.1} parent=1 // pred_region
      %s387 = sadd.s32 0, 0
      %s388 = smul.u32 2, %s387
      %s390 = ssub.s32 256, 256
      %391 = vsyncadd [#allocation6], %s390
      %s392 = smul.addr %s388, 128
      %s393 = scalar_lea.hbm %s4, %s392
      %s395 = sshll.u32 [#allocation5], 4
      %s396 = int_to_ptr.vmem [resolvable:$true] %s395
      %398 = dma.vmem_to_hbm [thread:$0]  %s396, 256, %s393, [#allocation6]
    $region29: #{tpu_custom_call.1} parent=1 // pred_fallthru
      _
    // Predicated region
    $region30: #{tpu_custom_call.1} parent=1 // pred_check
      _
    $region31: #{tpu_custom_call.1} parent=1 // pred_check_branch
      %400 = sbr.rel (0) target = $region33
    $region32: #{tpu_custom_call.1} parent=1 // pred_region
      _
    $region33: #{tpu_custom_call.1} parent=1 // pred_fallthru
      _
    // Predicated region
    $region34: #{tpu_custom_call.1} parent=1 // pred_check
      _
    $region35: #{tpu_custom_call.1} parent=1 // pred_check_branch
      %402 = sbr.rel (0) target = $region37
    $region36: #{tpu_custom_call.1} parent=1 // pred_region
      _
    $region37: #{tpu_custom_call.1} parent=1 // pred_fallthru
      _
    // Predicated region
    $region38: #{tpu_custom_call.1} parent=1 // pred_check
      _
    $region39: #{tpu_custom_call.1} parent=1 // pred_check_branch
      %404 = sbr.rel (0) target = $region41
    $region40: #{tpu_custom_call.1} parent=1 // pred_region
      %405 = dma.done [#allocation6], 256
    $region41: #{tpu_custom_call.1} parent=1 // pred_fallthru
      _
    // Predicated region
    $region42: #{tpu_custom_call.1} parent=1 // pred_check
      _
    $region43: #{tpu_custom_call.1} parent=1 // pred_check_branch
      %407 = sbr.rel (0) target = $region45
    $region44: #{tpu_custom_call.1} parent=1 // pred_region
      _
    $region45: #{tpu_custom_call.1} parent=1 // pred_fallthru
      _
    // Predicated region
    $region46: #{tpu_custom_call.1} parent=1 // pred_check
      _
    $region47: #{tpu_custom_call.1} parent=1 // pred_check_branch
      %409 = sbr.rel (0) target = $region49
    $region48: #{tpu_custom_call.1} parent=1 // pred_region
      _
    $region49: #{tpu_custom_call.1} parent=1 // pred_fallthru
      _
    %410 = vsyncpa [#allocation6], 1

</llo_original>
